<compile_context>
chip_gen: v5e
topology: v5e:2x2
jax: 0.10.0
libtpu: 0.0.40
codegen_flags: <defaults>
</compile_context>

<pallas_src>
import jax
import jax.numpy as jnp
from jax.experimental import pallas as pl
from jax.experimental.pallas import tpu as pltpu


def _make_kernel(*, n_stages, c_in, c_out, has_bias, remap_first):
    """Build the per-(batch, H-tile, W-tile) kernel body.

    Ref shapes (batch dim squeezed via `None` in the BlockSpecs):
      x_ref : (Cin, tile_h, tile_w)        input tile (VMEM)
      pw_ref: (tile_w, tile_wo) f32        W block-sum matrix, scale folded in
      w_ref : (Cout, Cin) f32   (SMEM)     1x1-conv weight (optional)
      b_ref : (Cout,)   f32     (SMEM)     1x1-conv bias   (optional)
      o_ref : (Cout|Cin, tho, tile_wo)     output tile (VMEM)
    """
    step = 1 << n_stages

    # TODO(synk): the Python unrolls below assume small channel counts
    # (module default in_channels=3); large Cin/Cout would want an MXU remap.
    def kernel(*refs):
        refs = list(refs)
        x_ref = refs.pop(0)
        pw_ref = refs.pop(0) if n_stages > 0 else None
        w_ref = refs.pop(0) if c_out is not None else None
        b_ref = refs.pop(0) if has_bias else None
        o_ref = refs.pop(0)

        _, tile_h, tile_w = x_ref.shape
        tho = tile_h // step

        # ---- H pooling (all stages) fused into `step` strided sublane loads
        if n_stages == 0:
            acc = x_ref[...].astype(jnp.float32)              # (Cin, tho, tw)
        else:
            acc = x_ref[:, pl.ds(0, tho, step), :].astype(jnp.float32)
            for dh in range(1, step):
                acc = acc + x_ref[:, pl.ds(dh, tho, step), :].astype(jnp.float32)
        # TODO(synk): verify via pl.lower_as_mlir that step>=4 strided sublane
        # loads do not materialize extra copies (perf-only; kernel is HBM-bound).

        # ---- optional 1x1 remap BEFORE W pooling (Cout < Cin): VPU FMAs -----
        if remap_first:
            chans = []
            for o in range(c_out):
                y = w_ref[o, 0] * acc[0]
                for c in range(1, c_in):
                    y = y + w_ref[o, c] * acc[c]
                chans.append(y)                                # (tho, tw)
            n_eff = c_out
        else:
            chans = None
            n_eff = c_in

        # ---- W pooling (all stages): one merged lane-dense MXU matmul -------
        if n_stages > 0:
            pw = pw_ref[...]                                   # (tw, two)
            if tho % 8 == 0:
                # Merge channels into the MXU M dimension (free relabel since
                # tho is sublane-aligned); single RHS push for all channels.
                if chans is None:
                    merged = acc.reshape(n_eff * tho, tile_w)
                else:
                    merged = jnp.concatenate(chans, axis=0)
                pooled = jnp.dot(merged, pw,
                                 preferred_element_type=jnp.float32)
                plist = [pooled[c * tho:(c + 1) * tho] for c in range(n_eff)]
            else:
                # tiny full-extent tile (Ho < 8): per-channel dots, no reshape
                src = chans if chans is not None else [acc[c] for c in range(c_in)]
                plist = [jnp.dot(src[c], pw, preferred_element_type=jnp.float32)
                         for c in range(n_eff)]
        else:
            plist = [acc[c] for c in range(n_eff)]

        # ---- write-out (+ optional remap-after / bias) -----------------------
        if c_out is None:
            for c in range(n_eff):
                o_ref[c] = plist[c].astype(o_ref.dtype)
        elif remap_first:
            for o in range(c_out):
                y = plist[o]
                if has_bias:
                    y = y + b_ref[o]
                o_ref[o] = y.astype(o_ref.dtype)
        else:
            for o in range(c_out):
                y = w_ref[o, 0] * plist[0]
                for c in range(1, c_in):
                    y = y + w_ref[o, c] * plist[c]
                if has_bias:
                    y = y + b_ref[o]
                o_ref[o] = y.astype(o_ref.dtype)

    return kernel


def _choose_tile_w(W, step):
    """Pick a W tile so the pooling matrix is one small diagonal block.

    Only tiles W when every output tile stays lane-dense (tile_w/step a
    multiple of 128).  Per-tile matmul K is kept <= max(512, 128*step) so the
    contraction stays cheap even on v5e's smaller MXU."""
    if step == 1:
        return W
    unit = 128 * step                       # keeps tile_wo a multiple of 128
    cands = [t for t in range(unit, W, unit) if W % t == 0]
    if not cands:
        return W                            # full-extent block is always legal
    k_cap = max(512, unit)
    good = [t for t in cands if t <= k_cap]
    return max(good) if good else min(cands)


def _choose_tile_h(H, row_bytes, step, budget_bytes):
    """Largest H tile that (a) divides H, (b) keeps both the input tile and the
    pooled output tile 8-sublane aligned, (c) keeps the per-step input block
    under `budget_bytes` (double-buffered blocks must fit scoped VMEM)."""
    base = 8 * step
    if H <= base or H % base != 0:
        return H                            # full-extent block is always legal
    best = base
    t = base
    while t <= H:
        if H % t == 0 and t * row_bytes <= budget_bytes:
            best = t
        t += base
    return best


def spatial_rescaler(x_nchw, *, n_stages=1, method="bilinear", multiplier=0.5,
                     conv_weight=None, conv_bias=None, tile_h=None, tile_w=None,
                     input_budget_bytes=6 << 20):
    """Forward pass of SpatialRescaler.

    x_nchw:      (N, C, H, W)  -- PyTorch layout, kept as-is (no transposes)
    conv_weight: (Cout, Cin, 1, 1) or None (out_channels=None -> no remap)
    conv_bias:   (Cout,) or None
    Returns (N, Cout_or_C, H/2**n_stages, W/2**n_stages), same dtype as input.
    """
    assert n_stages >= 0
    # TODO(synk): only the default ('bilinear', multiplier=0.5, even spatial
    # dims) configuration is implemented; other modes/scales need gather-based
    # interpolation weights.
    assert method == "bilinear" and multiplier == 0.5

    N, C, H, W = x_nchw.shape
    step = 1 << n_stages
    assert H % step == 0 and W % step == 0
    Ho, Wo = H // step, W // step
    itemsize = jnp.dtype(x_nchw.dtype).itemsize

    c_out = None if conv_weight is None else int(conv_weight.shape[0])
    has_bias = conv_bias is not None
    Cc = C if c_out is None else c_out
    remap_first = (c_out is not None) and (c_out < C) and (n_stages > 0)

    # ---- W tiling (pooling matrix is block-diagonal; one block per tile) ----
    if tile_w is None:
        tile_w = _choose_tile_w(W, step)
    assert W % tile_w == 0 and tile_w % step == 0
    tile_wo = tile_w // step
    assert tile_wo % 128 == 0 or tile_w == W
    n_wtiles = W // tile_w

    # ---- H tiling ------------------------------------------------------------
    if tile_h is None:
        tile_h = _choose_tile_h(H, C * tile_w * itemsize, step,
                                input_budget_bytes)
        # v7x has 2 TensorCores: make sure there are >= 2 parallel grid steps.
        base = 8 * step
        while (N * (H // tile_h) * n_wtiles) < 2 and tile_h % (2 * base) == 0:
            tile_h //= 2
    assert H % tile_h == 0 and tile_h % step == 0
    tho = tile_h // step
    assert tho % 8 == 0 or tile_h == H
    n_htiles = H // tile_h

    # TODO(synk): for tiny outputs (Wo < 128) masked narrow-lane stores plus
    # pallas_call overhead dominate; a plain-XLA fallback would be faster there.

    inputs = [x_nchw]
    in_specs = [pl.BlockSpec((None, C, tile_h, tile_w),
                             lambda n, t, wj: (n, 0, t, wj))]

    if n_stages > 0:
        # (tile_w, tile_wo) block-sum matrix with the 1/4**n_stages averaging
        # scale folded in.  Every diagonal block of the full (W, Wo) pooling
        # matrix is identical, so a constant index_map reuses this single
        # block for every W tile (fetched once, never re-DMA'd).
        # TODO(synk): if input is bf16, a bf16 accumulate/matmul path (pw
        # entries exact in bf16) would avoid the multi-pass f32 MXU mode.
        col = jnp.arange(tile_w, dtype=jnp.int32) // step
        pw = (col[:, None] == jnp.arange(tile_wo, dtype=jnp.int32)[None, :])
        pw = pw.astype(jnp.float32) * (0.25 ** n_stages)
        inputs.append(pw)
        in_specs.append(pl.BlockSpec((tile_w, tile_wo),
                                     lambda n, t, wj: (0, 0)))

    if c_out is not None:
        assert conv_weight.shape[1] == C
        w = conv_weight.reshape(c_out, C).astype(jnp.float32)
        inputs.append(w)
        in_specs.append(pl.BlockSpec(memory_space=pltpu.MemorySpace.SMEM))
        if has_bias:
            inputs.append(conv_bias.reshape(c_out).astype(jnp.float32))
            in_specs.append(pl.BlockSpec(memory_space=pltpu.MemorySpace.SMEM))

    # Derive the VMEM limit from the actual double-buffered allocation (plus
    # slack for compiler-internal scratch); never below the known-good 32 MiB
    # default, capped for v7x's 64 MiB physical VMEM.
    in_block = C * tile_h * tile_w * itemsize
    out_block = Cc * tho * tile_wo * itemsize
    pw_block = tile_w * tile_wo * 4 if n_stages > 0 else 0
    vmem_need = 2 * (in_block + out_block + pw_block) + (4 << 20)
    vmem_limit = int(min(max(vmem_need, 32 << 20), 64 << 20))

    kernel = _make_kernel(n_stages=n_stages, c_in=C, c_out=c_out,
                          has_bias=has_bias, remap_first=remap_first)

    return pl.pallas_call(
        kernel,
        out_shape=jax.ShapeDtypeStruct((N, Cc, Ho, Wo), x_nchw.dtype),
        grid_spec=pltpu.PrefetchScalarGridSpec(
            num_scalar_prefetch=0,
            grid=(N, n_htiles, n_wtiles),
            in_specs=in_specs,
            out_specs=pl.BlockSpec((None, Cc, tho, tile_wo),
                                   lambda n, t, wj: (n, 0, t, wj)),
        ),
        compiler_params=pltpu.CompilerParams(
            dimension_semantics=("parallel", "parallel", "parallel"),
            vmem_limit_bytes=vmem_limit),
    )(*inputs)


def _reference(x, conv_weight, conv_bias, n_stages):
    """Pure-JAX reference (bilinear 0.5x == 2x2 average pooling)."""
    for _ in range(n_stages):
        n, c, h, w = x.shape
        x = x.reshape(n, c, h // 2, 2, w // 2, 2).mean(axis=(3, 5))
    if conv_weight is not None:
        co = conv_weight.shape[0]
        x = jnp.einsum("nchw,oc->nohw", x, conv_weight.reshape(co, -1))
        if conv_bias is not None:
            x = x + conv_bias.reshape(1, co, 1, 1)
    return x


if __name__ == "__main__":
    key = jax.random.PRNGKey(0)
    k_x, k_w, k_b, k_x2, k_x3, k_w2, k_b2 = jax.random.split(key, 7)

    N, Cin, H, W = 2, 4, 16, 16
    Cout = 8
    x = jax.random.normal(k_x, (N, Cin, H, W), dtype=jnp.float32)
    conv_w = jax.random.normal(k_w, (Cout, Cin, 1, 1),
                               dtype=jnp.float32) / jnp.sqrt(Cin)
    conv_b = jax.random.normal(k_b, (Cout,), dtype=jnp.float32)

    # 1) n_stages=1 with channel remap (out_channels=Cout, bias=False)
    y = jax.block_until_ready(spatial_rescaler(x, n_stages=1, conv_weight=conv_w))
    ref = _reference(x, conv_w, None, 1)
    assert y.shape == (N, Cout, H // 2, W // 2)
    assert jnp.allclose(y, ref, atol=1e-5, rtol=1e-5)

    # 2) n_stages=2, no channel remap (tiny Ho -> per-channel dot fallback)
    y2 = jax.block_until_ready(spatial_rescaler(x, n_stages=2))
    ref2 = _reference(x, None, None, 2)
    assert y2.shape == (N, Cin, H // 4, W // 4)
    assert jnp.allclose(y2, ref2, atol=1e-5, rtol=1e-5)

    # 3) n_stages=1 with channel remap + bias
    y3 = jax.block_until_ready(
        spatial_rescaler(x, n_stages=1, conv_weight=conv_w, conv_bias=conv_b))
    ref3 = _reference(x, conv_w, conv_b, 1)
    assert jnp.allclose(y3, ref3, atol=1e-5, rtol=1e-5)

    # 4) multi-H-tile grid path (grid=(1, 2, 1) with tile_h < H)
    x4 = jax.random.normal(k_x2, (1, 3, 32, 128), dtype=jnp.float32)
    y4 = jax.block_until_ready(spatial_rescaler(x4, n_stages=1, tile_h=16))
    ref4 = _reference(x4, None, None, 1)
    assert y4.shape == (1, 3, 16, 64)
    assert jnp.allclose(y4, ref4, atol=1e-5, rtol=1e-5)

    # 5) remap-first path (out_channels < in_channels) + bias
    conv_w2 = jax.random.normal(k_w2, (2, Cin, 1, 1),
                                dtype=jnp.float32) / jnp.sqrt(Cin)
    conv_b2 = jax.random.normal(k_b2, (2,), dtype=jnp.float32)
    y5 = jax.block_until_ready(
        spatial_rescaler(x, n_stages=1, conv_weight=conv_w2, conv_bias=conv_b2))
    ref5 = _reference(x, conv_w2, conv_b2, 1)
    assert y5.shape == (N, 2, H // 2, W // 2)
    assert jnp.allclose(y5, ref5, atol=1e-5, rtol=1e-5)

    # 6) W-tiled grid path (block-diagonal pooling matrix; grid=(1, 1, 2))
    x6 = jax.random.normal(k_x3, (1, 3, 16, 512), dtype=jnp.float32)
    y6 = jax.block_until_ready(spatial_rescaler(x6, n_stages=1))
    ref6 = _reference(x6, None, None, 1)
    assert y6.shape == (1, 3, 8, 256)
    assert jnp.allclose(y6, ref6, atol=1e-5, rtol=1e-5)

    # 7) n_stages=0 (pure channel remap, no resizing)
    y7 = jax.block_until_ready(
        spatial_rescaler(x, n_stages=0, conv_weight=conv_w, conv_bias=conv_b))
    ref7 = _reference(x, conv_w, conv_b, 0)
    assert y7.shape == (N, Cout, H, W)
    assert jnp.allclose(y7, ref7, atol=1e-5, rtol=1e-5)

    print("KERNEL_OK")
</pallas_src>

<mosaic_0001>
module attributes {stable_mosaic.version = 11 : i64} {
  func.func @kernel(%arg0: i32, %arg1: i32, %arg2: i32, %arg3: memref<1x4x16x16xf32, #tpu.memory_space<vmem>>, %arg4: memref<16x8xf32, #tpu.memory_space<vmem>>, %arg5: memref<8x4xf32, #tpu.memory_space<smem>>, %arg6: memref<1x8x8x8xf32, #tpu.memory_space<vmem>>) attributes {dimension_semantics = [#tpu.dimension_semantics<parallel>, #tpu.dimension_semantics<parallel>, #tpu.dimension_semantics<parallel>], iteration_bounds = array<i64: 2, 1, 1>, scalar_prefetch = 0 : i64, scratch_operands = 0 : i64, tpu.core_type = #tpu.core_type<tc>, window_params = [{transform_indices = @transform_0, window_bounds = array<i64: 1, 4, 16, 16>}, {pipeline_mode = #tpu.pipeline_mode<synchronous>, transform_indices = @transform_1, window_bounds = array<i64: 16, 8>}, {transform_indices = @transform_2, window_bounds = array<i64: 8, 4>}, {transform_indices = @transform_3, window_bounds = array<i64: 1, 8, 8, 8>}]} {
    %c0 = arith.constant 0 : index
    %c0_0 = arith.constant 0 : index
    %c0_1 = arith.constant 0 : index
    %c0_2 = arith.constant 0 : index
    %0 = tpu.strided_load %arg3[%c0, %c0_0, %c0_1, %c0_2] {strides = array<i32: 1, 1, 2, 1>} : memref<1x4x16x16xf32, #tpu.memory_space<vmem>>, vector<1x4x8x16xf32>
    %1 = vector.shape_cast %0 : vector<1x4x8x16xf32> to vector<4x8x16xf32>
    %c0_3 = arith.constant 0 : index
    %c0_4 = arith.constant 0 : index
    %c1 = arith.constant 1 : index
    %c0_5 = arith.constant 0 : index
    %2 = tpu.strided_load %arg3[%c0_3, %c0_4, %c1, %c0_5] {strides = array<i32: 1, 1, 2, 1>} : memref<1x4x16x16xf32, #tpu.memory_space<vmem>>, vector<1x4x8x16xf32>
    %3 = vector.shape_cast %2 : vector<1x4x8x16xf32> to vector<4x8x16xf32>
    %4 = arith.addf %1, %3 : vector<4x8x16xf32>
    %c0_6 = arith.constant 0 : index
    %c0_7 = arith.constant 0 : index
    %5 = vector.load %arg4[%c0_6, %c0_7] : memref<16x8xf32, #tpu.memory_space<vmem>>, vector<16x8xf32>
    %6 = vector.shape_cast %4 : vector<4x8x16xf32> to vector<32x16xf32>
    %cst = arith.constant dense<0.000000e+00> : vector<32x8xf32>
    %7 = tpu.matmul %6, %5, %cst {dimension_numbers = #tpu.dot_dimension_numbers<[1], [0], [0], [1], [0, 0, 1, 1], [], []>} : vector<32x16xf32>, vector<16x8xf32>, vector<32x8xf32> -> vector<32x8xf32>
    %8 = vector.extract_strided_slice %7 {offsets = [0, 0], sizes = [8, 8], strides = [1, 1]} : vector<32x8xf32> to vector<8x8xf32>
    %9 = vector.extract_strided_slice %7 {offsets = [8, 0], sizes = [8, 8], strides = [1, 1]} : vector<32x8xf32> to vector<8x8xf32>
    %10 = vector.extract_strided_slice %7 {offsets = [16, 0], sizes = [8, 8], strides = [1, 1]} : vector<32x8xf32> to vector<8x8xf32>
    %11 = vector.extract_strided_slice %7 {offsets = [24, 0], sizes = [8, 8], strides = [1, 1]} : vector<32x8xf32> to vector<8x8xf32>
    %c0_8 = arith.constant 0 : index
    %c0_9 = arith.constant 0 : index
    %12 = memref.load %arg5[%c0_8, %c0_9] : memref<8x4xf32, #tpu.memory_space<smem>>
    %13 = vector.broadcast %12 : f32 to vector<8x8xf32>
    %14 = arith.mulf %13, %8 : vector<8x8xf32>
    %c0_10 = arith.constant 0 : index
    %c1_11 = arith.constant 1 : index
    %15 = memref.load %arg5[%c0_10, %c1_11] : memref<8x4xf32, #tpu.memory_space<smem>>
    %16 = vector.broadcast %15 : f32 to vector<8x8xf32>
    %17 = arith.mulf %16, %9 : vector<8x8xf32>
    %18 = arith.addf %14, %17 : vector<8x8xf32>
    %c0_12 = arith.constant 0 : index
    %c2 = arith.constant 2 : index
    %19 = memref.load %arg5[%c0_12, %c2] : memref<8x4xf32, #tpu.memory_space<smem>>
    %20 = vector.broadcast %19 : f32 to vector<8x8xf32>
    %21 = arith.mulf %20, %10 : vector<8x8xf32>
    %22 = arith.addf %18, %21 : vector<8x8xf32>
    %c0_13 = arith.constant 0 : index
    %c3 = arith.constant 3 : index
    %23 = memref.load %arg5[%c0_13, %c3] : memref<8x4xf32, #tpu.memory_space<smem>>
    %24 = vector.broadcast %23 : f32 to vector<8x8xf32>
    %25 = arith.mulf %24, %11 : vector<8x8xf32>
    %26 = arith.addf %22, %25 : vector<8x8xf32>
    %c0_14 = arith.constant 0 : index
    %c0_15 = arith.constant 0 : index
    %c0_16 = arith.constant 0 : index
    %c0_17 = arith.constant 0 : index
    %27 = vector.load %arg6[%c0_14, %c0_15, %c0_16, %c0_17] : memref<1x8x8x8xf32, #tpu.memory_space<vmem>>, vector<1x1x8x8xf32>
    %28 = vector.shape_cast %27 : vector<1x1x8x8xf32> to vector<8x8xf32>
    %29 = vector.shape_cast %26 : vector<8x8xf32> to vector<1x1x8x8xf32>
    tpu.vector_store %arg6[%c0_14, %c0_15, %c0_16, %c0_17], %29 {strides = array<i32>} : memref<1x8x8x8xf32, #tpu.memory_space<vmem>>, vector<1x1x8x8xf32>,
    %c1_18 = arith.constant 1 : index
    %c0_19 = arith.constant 0 : index
    %30 = memref.load %arg5[%c1_18, %c0_19] : memref<8x4xf32, #tpu.memory_space<smem>>
    %31 = vector.broadcast %30 : f32 to vector<8x8xf32>
    %32 = arith.mulf %31, %8 : vector<8x8xf32>
    %c1_20 = arith.constant 1 : index
    %c1_21 = arith.constant 1 : index
    %33 = memref.load %arg5[%c1_20, %c1_21] : memref<8x4xf32, #tpu.memory_space<smem>>
    %34 = vector.broadcast %33 : f32 to vector<8x8xf32>
    %35 = arith.mulf %34, %9 : vector<8x8xf32>
    %36 = arith.addf %32, %35 : vector<8x8xf32>
    %c1_22 = arith.constant 1 : index
    %c2_23 = arith.constant 2 : index
    %37 = memref.load %arg5[%c1_22, %c2_23] : memref<8x4xf32, #tpu.memory_space<smem>>
    %38 = vector.broadcast %37 : f32 to vector<8x8xf32>
    %39 = arith.mulf %38, %10 : vector<8x8xf32>
    %40 = arith.addf %36, %39 : vector<8x8xf32>
    %c1_24 = arith.constant 1 : index
    %c3_25 = arith.constant 3 : index
    %41 = memref.load %arg5[%c1_24, %c3_25] : memref<8x4xf32, #tpu.memory_space<smem>>
    %42 = vector.broadcast %41 : f32 to vector<8x8xf32>
    %43 = arith.mulf %42, %11 : vector<8x8xf32>
    %44 = arith.addf %40, %43 : vector<8x8xf32>
    %c0_26 = arith.constant 0 : index
    %c1_27 = arith.constant 1 : index
    %c0_28 = arith.constant 0 : index
    %c0_29 = arith.constant 0 : index
    %45 = vector.load %arg6[%c0_26, %c1_27, %c0_28, %c0_29] : memref<1x8x8x8xf32, #tpu.memory_space<vmem>>, vector<1x1x8x8xf32>
    %46 = vector.shape_cast %45 : vector<1x1x8x8xf32> to vector<8x8xf32>
    %47 = vector.shape_cast %44 : vector<8x8xf32> to vector<1x1x8x8xf32>
    tpu.vector_store %arg6[%c0_26, %c1_27, %c0_28, %c0_29], %47 {strides = array<i32>} : memref<1x8x8x8xf32, #tpu.memory_space<vmem>>, vector<1x1x8x8xf32>,
    %c2_30 = arith.constant 2 : index
    %c0_31 = arith.constant 0 : index
    %48 = memref.load %arg5[%c2_30, %c0_31] : memref<8x4xf32, #tpu.memory_space<smem>>
    %49 = vector.broadcast %48 : f32 to vector<8x8xf32>
    %50 = arith.mulf %49, %8 : vector<8x8xf32>
    %c2_32 = arith.constant 2 : index
    %c1_33 = arith.constant 1 : index
    %51 = memref.load %arg5[%c2_32, %c1_33] : memref<8x4xf32, #tpu.memory_space<smem>>
    %52 = vector.broadcast %51 : f32 to vector<8x8xf32>
    %53 = arith.mulf %52, %9 : vector<8x8xf32>
    %54 = arith.addf %50, %53 : vector<8x8xf32>
    %c2_34 = arith.constant 2 : index
    %c2_35 = arith.constant 2 : index
    %55 = memref.load %arg5[%c2_34, %c2_35] : memref<8x4xf32, #tpu.memory_space<smem>>
    %56 = vector.broadcast %55 : f32 to vector<8x8xf32>
    %57 = arith.mulf %56, %10 : vector<8x8xf32>
    %58 = arith.addf %54, %57 : vector<8x8xf32>
    %c2_36 = arith.constant 2 : index
    %c3_37 = arith.constant 3 : index
    %59 = memref.load %arg5[%c2_36, %c3_37] : memref<8x4xf32, #tpu.memory_space<smem>>
    %60 = vector.broadcast %59 : f32 to vector<8x8xf32>
    %61 = arith.mulf %60, %11 : vector<8x8xf32>
    %62 = arith.addf %58, %61 : vector<8x8xf32>
    %c0_38 = arith.constant 0 : index
    %c2_39 = arith.constant 2 : index
    %c0_40 = arith.constant 0 : index
    %c0_41 = arith.constant 0 : index
    %63 = vector.load %arg6[%c0_38, %c2_39, %c0_40, %c0_41] : memref<1x8x8x8xf32, #tpu.memory_space<vmem>>, vector<1x1x8x8xf32>
    %64 = vector.shape_cast %63 : vector<1x1x8x8xf32> to vector<8x8xf32>
    %65 = vector.shape_cast %62 : vector<8x8xf32> to vector<1x1x8x8xf32>
    tpu.vector_store %arg6[%c0_38, %c2_39, %c0_40, %c0_41], %65 {strides = array<i32>} : memref<1x8x8x8xf32, #tpu.memory_space<vmem>>, vector<1x1x8x8xf32>,
    %c3_42 = arith.constant 3 : index
    %c0_43 = arith.constant 0 : index
    %66 = memref.load %arg5[%c3_42, %c0_43] : memref<8x4xf32, #tpu.memory_space<smem>>
    %67 = vector.broadcast %66 : f32 to vector<8x8xf32>
    %68 = arith.mulf %67, %8 : vector<8x8xf32>
    %c3_44 = arith.constant 3 : index
    %c1_45 = arith.constant 1 : index
    %69 = memref.load %arg5[%c3_44, %c1_45] : memref<8x4xf32, #tpu.memory_space<smem>>
    %70 = vector.broadcast %69 : f32 to vector<8x8xf32>
    %71 = arith.mulf %70, %9 : vector<8x8xf32>
    %72 = arith.addf %68, %71 : vector<8x8xf32>
    %c3_46 = arith.constant 3 : index
    %c2_47 = arith.constant 2 : index
    %73 = memref.load %arg5[%c3_46, %c2_47] : memref<8x4xf32, #tpu.memory_space<smem>>
    %74 = vector.broadcast %73 : f32 to vector<8x8xf32>
    %75 = arith.mulf %74, %10 : vector<8x8xf32>
    %76 = arith.addf %72, %75 : vector<8x8xf32>
    %c3_48 = arith.constant 3 : index
    %c3_49 = arith.constant 3 : index
    %77 = memref.load %arg5[%c3_48, %c3_49] : memref<8x4xf32, #tpu.memory_space<smem>>
    %78 = vector.broadcast %77 : f32 to vector<8x8xf32>
    %79 = arith.mulf %78, %11 : vector<8x8xf32>
    %80 = arith.addf %76, %79 : vector<8x8xf32>
    %c0_50 = arith.constant 0 : index
    %c3_51 = arith.constant 3 : index
    %c0_52 = arith.constant 0 : index
    %c0_53 = arith.constant 0 : index
    %81 = vector.load %arg6[%c0_50, %c3_51, %c0_52, %c0_53] : memref<1x8x8x8xf32, #tpu.memory_space<vmem>>, vector<1x1x8x8xf32>
    %82 = vector.shape_cast %81 : vector<1x1x8x8xf32> to vector<8x8xf32>
    %83 = vector.shape_cast %80 : vector<8x8xf32> to vector<1x1x8x8xf32>
    tpu.vector_store %arg6[%c0_50, %c3_51, %c0_52, %c0_53], %83 {strides = array<i32>} : memref<1x8x8x8xf32, #tpu.memory_space<vmem>>, vector<1x1x8x8xf32>,
    %c4 = arith.constant 4 : index
    %c0_54 = arith.constant 0 : index
    %84 = memref.load %arg5[%c4, %c0_54] : memref<8x4xf32, #tpu.memory_space<smem>>
    %85 = vector.broadcast %84 : f32 to vector<8x8xf32>
    %86 = arith.mulf %85, %8 : vector<8x8xf32>
    %c4_55 = arith.constant 4 : index
    %c1_56 = arith.constant 1 : index
    %87 = memref.load %arg5[%c4_55, %c1_56] : memref<8x4xf32, #tpu.memory_space<smem>>
    %88 = vector.broadcast %87 : f32 to vector<8x8xf32>
    %89 = arith.mulf %88, %9 : vector<8x8xf32>
    %90 = arith.addf %86, %89 : vector<8x8xf32>
    %c4_57 = arith.constant 4 : index
    %c2_58 = arith.constant 2 : index
    %91 = memref.load %arg5[%c4_57, %c2_58] : memref<8x4xf32, #tpu.memory_space<smem>>
    %92 = vector.broadcast %91 : f32 to vector<8x8xf32>
    %93 = arith.mulf %92, %10 : vector<8x8xf32>
    %94 = arith.addf %90, %93 : vector<8x8xf32>
    %c4_59 = arith.constant 4 : index
    %c3_60 = arith.constant 3 : index
    %95 = memref.load %arg5[%c4_59, %c3_60] : memref<8x4xf32, #tpu.memory_space<smem>>
    %96 = vector.broadcast %95 : f32 to vector<8x8xf32>
    %97 = arith.mulf %96, %11 : vector<8x8xf32>
    %98 = arith.addf %94, %97 : vector<8x8xf32>
    %c0_61 = arith.constant 0 : index
    %c4_62 = arith.constant 4 : index
    %c0_63 = arith.constant 0 : index
    %c0_64 = arith.constant 0 : index
    %99 = vector.load %arg6[%c0_61, %c4_62, %c0_63, %c0_64] : memref<1x8x8x8xf32, #tpu.memory_space<vmem>>, vector<1x1x8x8xf32>
    %100 = vector.shape_cast %99 : vector<1x1x8x8xf32> to vector<8x8xf32>
    %101 = vector.shape_cast %98 : vector<8x8xf32> to vector<1x1x8x8xf32>
    tpu.vector_store %arg6[%c0_61, %c4_62, %c0_63, %c0_64], %101 {strides = array<i32>} : memref<1x8x8x8xf32, #tpu.memory_space<vmem>>, vector<1x1x8x8xf32>,
    %c5 = arith.constant 5 : index
    %c0_65 = arith.constant 0 : index
    %102 = memref.load %arg5[%c5, %c0_65] : memref<8x4xf32, #tpu.memory_space<smem>>
    %103 = vector.broadcast %102 : f32 to vector<8x8xf32>
    %104 = arith.mulf %103, %8 : vector<8x8xf32>
    %c5_66 = arith.constant 5 : index
    %c1_67 = arith.constant 1 : index
    %105 = memref.load %arg5[%c5_66, %c1_67] : memref<8x4xf32, #tpu.memory_space<smem>>
    %106 = vector.broadcast %105 : f32 to vector<8x8xf32>
    %107 = arith.mulf %106, %9 : vector<8x8xf32>
    %108 = arith.addf %104, %107 : vector<8x8xf32>
    %c5_68 = arith.constant 5 : index
    %c2_69 = arith.constant 2 : index
    %109 = memref.load %arg5[%c5_68, %c2_69] : memref<8x4xf32, #tpu.memory_space<smem>>
    %110 = vector.broadcast %109 : f32 to vector<8x8xf32>
    %111 = arith.mulf %110, %10 : vector<8x8xf32>
    %112 = arith.addf %108, %111 : vector<8x8xf32>
    %c5_70 = arith.constant 5 : index
    %c3_71 = arith.constant 3 : index
    %113 = memref.load %arg5[%c5_70, %c3_71] : memref<8x4xf32, #tpu.memory_space<smem>>
    %114 = vector.broadcast %113 : f32 to vector<8x8xf32>
    %115 = arith.mulf %114, %11 : vector<8x8xf32>
    %116 = arith.addf %112, %115 : vector<8x8xf32>
    %c0_72 = arith.constant 0 : index
    %c5_73 = arith.constant 5 : index
    %c0_74 = arith.constant 0 : index
    %c0_75 = arith.constant 0 : index
    %117 = vector.load %arg6[%c0_72, %c5_73, %c0_74, %c0_75] : memref<1x8x8x8xf32, #tpu.memory_space<vmem>>, vector<1x1x8x8xf32>
    %118 = vector.shape_cast %117 : vector<1x1x8x8xf32> to vector<8x8xf32>
    %119 = vector.shape_cast %116 : vector<8x8xf32> to vector<1x1x8x8xf32>
    tpu.vector_store %arg6[%c0_72, %c5_73, %c0_74, %c0_75], %119 {strides = array<i32>} : memref<1x8x8x8xf32, #tpu.memory_space<vmem>>, vector<1x1x8x8xf32>,
    %c6 = arith.constant 6 : index
    %c0_76 = arith.constant 0 : index
    %120 = memref.load %arg5[%c6, %c0_76] : memref<8x4xf32, #tpu.memory_space<smem>>
    %121 = vector.broadcast %120 : f32 to vector<8x8xf32>
    %122 = arith.mulf %121, %8 : vector<8x8xf32>
    %c6_77 = arith.constant 6 : index
    %c1_78 = arith.constant 1 : index
    %123 = memref.load %arg5[%c6_77, %c1_78] : memref<8x4xf32, #tpu.memory_space<smem>>
    %124 = vector.broadcast %123 : f32 to vector<8x8xf32>
    %125 = arith.mulf %124, %9 : vector<8x8xf32>
    %126 = arith.addf %122, %125 : vector<8x8xf32>
    %c6_79 = arith.constant 6 : index
    %c2_80 = arith.constant 2 : index
    %127 = memref.load %arg5[%c6_79, %c2_80] : memref<8x4xf32, #tpu.memory_space<smem>>
    %128 = vector.broadcast %127 : f32 to vector<8x8xf32>
    %129 = arith.mulf %128, %10 : vector<8x8xf32>
    %130 = arith.addf %126, %129 : vector<8x8xf32>
    %c6_81 = arith.constant 6 : index
    %c3_82 = arith.constant 3 : index
    %131 = memref.load %arg5[%c6_81, %c3_82] : memref<8x4xf32, #tpu.memory_space<smem>>
    %132 = vector.broadcast %131 : f32 to vector<8x8xf32>
    %133 = arith.mulf %132, %11 : vector<8x8xf32>
    %134 = arith.addf %130, %133 : vector<8x8xf32>
    %c0_83 = arith.constant 0 : index
    %c6_84 = arith.constant 6 : index
    %c0_85 = arith.constant 0 : index
    %c0_86 = arith.constant 0 : index
    %135 = vector.load %arg6[%c0_83, %c6_84, %c0_85, %c0_86] : memref<1x8x8x8xf32, #tpu.memory_space<vmem>>, vector<1x1x8x8xf32>
    %136 = vector.shape_cast %135 : vector<1x1x8x8xf32> to vector<8x8xf32>
    %137 = vector.shape_cast %134 : vector<8x8xf32> to vector<1x1x8x8xf32>
    tpu.vector_store %arg6[%c0_83, %c6_84, %c0_85, %c0_86], %137 {strides = array<i32>} : memref<1x8x8x8xf32, #tpu.memory_space<vmem>>, vector<1x1x8x8xf32>,
    %c7 = arith.constant 7 : index
    %c0_87 = arith.constant 0 : index
    %138 = memref.load %arg5[%c7, %c0_87] : memref<8x4xf32, #tpu.memory_space<smem>>
    %139 = vector.broadcast %138 : f32 to vector<8x8xf32>
    %140 = arith.mulf %139, %8 : vector<8x8xf32>
    %c7_88 = arith.constant 7 : index
    %c1_89 = arith.constant 1 : index
    %141 = memref.load %arg5[%c7_88, %c1_89] : memref<8x4xf32, #tpu.memory_space<smem>>
    %142 = vector.broadcast %141 : f32 to vector<8x8xf32>
    %143 = arith.mulf %142, %9 : vector<8x8xf32>
    %144 = arith.addf %140, %143 : vector<8x8xf32>
    %c7_90 = arith.constant 7 : index
    %c2_91 = arith.constant 2 : index
    %145 = memref.load %arg5[%c7_90, %c2_91] : memref<8x4xf32, #tpu.memory_space<smem>>
    %146 = vector.broadcast %145 : f32 to vector<8x8xf32>
    %147 = arith.mulf %146, %10 : vector<8x8xf32>
    %148 = arith.addf %144, %147 : vector<8x8xf32>
    %c7_92 = arith.constant 7 : index
    %c3_93 = arith.constant 3 : index
    %149 = memref.load %arg5[%c7_92, %c3_93] : memref<8x4xf32, #tpu.memory_space<smem>>
    %150 = vector.broadcast %149 : f32 to vector<8x8xf32>
    %151 = arith.mulf %150, %11 : vector<8x8xf32>
    %152 = arith.addf %148, %151 : vector<8x8xf32>
    %c0_94 = arith.constant 0 : index
    %c7_95 = arith.constant 7 : index
    %c0_96 = arith.constant 0 : index
    %c0_97 = arith.constant 0 : index
    %153 = vector.load %arg6[%c0_94, %c7_95, %c0_96, %c0_97] : memref<1x8x8x8xf32, #tpu.memory_space<vmem>>, vector<1x1x8x8xf32>
    %154 = vector.shape_cast %153 : vector<1x1x8x8xf32> to vector<8x8xf32>
    %155 = vector.shape_cast %152 : vector<8x8xf32> to vector<1x1x8x8xf32>
    tpu.vector_store %arg6[%c0_94, %c7_95, %c0_96, %c0_97], %155 {strides = array<i32>} : memref<1x8x8x8xf32, #tpu.memory_space<vmem>>, vector<1x1x8x8xf32>,
    return
  }
  func.func @transform_0(%arg0: i32, %arg1: i32, %arg2: i32) -> (i32, i32, i32, i32) {
    %c0_i32 = arith.constant 0 : i32
    %c0_i32_0 = arith.constant 0 : i32
    return %arg0, %c0_i32, %arg1, %arg2 : i32, i32, i32, i32
  }
  func.func @transform_1(%arg0: i32, %arg1: i32, %arg2: i32) -> (i32, i32) {
    %c0_i32 = arith.constant 0 : i32
    %c0_i32_0 = arith.constant 0 : i32
    %c0_i32_1 = arith.constant 0 : i32
    return %c0_i32, %c0_i32_0 : i32, i32
  }
  func.func @transform_2(%arg0: i32, %arg1: i32, %arg2: i32) -> (i32, i32) {
    %c0_i32 = arith.constant 0 : i32
    %c0_i32_0 = arith.constant 0 : i32
    %c0_i32_1 = arith.constant 0 : i32
    return %c0_i32, %c0_i32_0 : i32, i32
  }
  func.func @transform_3(%arg0: i32, %arg1: i32, %arg2: i32) -> (i32, i32, i32, i32) {
    %c0_i32 = arith.constant 0 : i32
    %c0_i32_0 = arith.constant 0 : i32
    return %arg0, %c0_i32, %arg1, %arg2 : i32, i32, i32, i32
  }
}

</mosaic_0001>

<llo_original>
// kernel: tpu_custom_call.1
$region0: #{tpu_custom_call.1}
  #allocation0 [shape = 'u32[]', space=smem, size = 0x4, offset = 0x4, fixed_abs, tag = 'smem constant byte address 0x4 - core index']
  #allocation1 [shape = 'u32[72,128]{1,0:T(1,128)}', space=vmem, size = 0x9000, scoped, tag = 'internal scratch']
  %s0 = inlined_call_operand.hbm [shape: f32[2,4,16,16], index: 0, kind: input, shape index: {}]
  %s1 = inlined_call_operand.vmem [shape: f32[16,8], index: 1, kind: input, shape index: {}]
  %s2 = inlined_call_operand.vmem [shape: f32[8,4], index: 2, kind: input, shape index: {}]
  %s3 = inlined_call_operand.hbm [shape: f32[2,8,8,8], index: 3, kind: output, shape index: {}]
  %s4 = sld [smem:[#allocation0]]
  $region53: #{tpu_custom_call.1} parent=0
    _
  %s6 = ssub.s32 1, %s4
  %s7 = scalar_select 0, %s6, %s4
  $region1: #{tpu_custom_call.1} parent=0
    #allocation2 [shape = 'u8[65536]{0}', space=vmem, size = 0x10000, scoped, tag = 'input window, operand 0']
    #allocation3 [shape = 's32[2]{0}', space=sflag, size = 0x8, scoped, tag = 'scoped memory for tpu_custom_call.1']
    #allocation4 [shape = 's32[2]{0}', space=sflag, size = 0x8, scoped, tag = 'scoped memory for tpu_custom_call.1']
    #allocation5 [shape = 's32[2]{0}', space=sflag, size = 0x8, scoped, tag = 'scoped memory for tpu_custom_call.1']
    #allocation6 [shape = 'u8[4096]{0}', space=smem, size = 0x1000, scoped, tag = 'input window, operand 2, single buffered']
    #allocation7 [shape = 'u8[65536]{0}', space=vmem, size = 0x10000, scoped, tag = 'output window, operand 0']
    %8 = vsyncpa [#allocation3], 0
    %s9 = scalar_lea.sflag [#allocation3], 1
    %10 = vsyncpa %s9, 0
    %11 = vsyncpa [#allocation5], 0
    %12 = vsyncpa [#allocation4], 0
    %s13 = scalar_lea.sflag [#allocation4], 1
    %14 = vsyncpa %s13, 0
    loop: start=0, step=1, limit=4
    $region2: #{tpu_custom_call.1} parent=1 // loop_pre_header
      _
    $region3: #{tpu_custom_call.1} parent=1 // loop_header
      %s16 = sphi 0, %s20
      %p17 = scmp.ge.s32.totalorder %s16, 4
      %s23 = sphi 0, %s42
      %s24 = sphi 0, %s38
      %s25 = sphi 0, %s34
      %s26 = sphi 0, %s23
      %s27 = sphi 0, %s24
      %s28 = sphi 0, %s25
      %s29 = sphi 0, %s26
      %s30 = sphi 0, %s27
      %s31 = sphi 0, %s28
      %s49 = sphi 0, %s51
      %s52 = sphi 0, %s49
      %s53 = sphi 0, %s52
      %s69 = sphi 0, %s53
      %s73 = sphi 0, %s73
      %s75 = sphi 0, %s73
      %s76 = sphi 0, %s75
      %s90 = sphi 0, %s76
      %s94 = sphi 0, %s94
      %s96 = sphi 0, %s94
      %s97 = sphi 0, %s96
      %s111 = sphi 0, %s97
      %s121 = sphi 0, %s123
      %s124 = sphi 0, %s121
      %s125 = sphi 0, %s124
      %s141 = sphi 0, %s125
    $region4: #{tpu_custom_call.1} parent=1 // loop_header_branch
      %19 = sbr.rel (%p17) target = $region8
    $region5: #{tpu_custom_call.1} parent=1 // loop_body
      %s21 = ssub.s32 %s16, 1
      %s22 = ssub.s32 %s16, 2
      %s32 = sadd.s32 1, %s25
      %p33 = scmp.ge.s32.totalorder %s32, 1
      %s34 = scalar_select %p33, 0, %s32
      %s35 = sadd.s32 1, %s24
      %s36 = scalar_select %p33, %s35, %s24
      %p37 = scmp.ge.s32.totalorder %s36, 1
      %s38 = scalar_select %p37, 0, %s36
      %s39 = sadd.s32 1, %s23
      %s40 = scalar_select %p37, %s39, %s23
      %p41 = scmp.ge.s32.totalorder %s40, 2
      %s42 = scalar_select %p41, 0, %s40
      %s43 = ssub.s32 %s23, %s42
      %s44 = ssub.s32 %s24, %s38
      %s45 = sor.u32 %s43, %s44
      %s46 = ssub.s32 %s25, %s34
      %s47 = sor.u32 %s45, %s46
      %p48 = scmp.eq.s32.totalorder %s47, 0
      %s50 = sadd.s32 %s49, 1
      %s51 = scalar_select %p48, %s49, %s50
      %p54 = pneg %p48
      %p55 = scmp.eq.s32.totalorder %s16, 1
      %p56 = por %p54, %p55
      %p57 = scmp.ne.s32.totalorder %s49, %s52
      %p58 = scmp.eq.s32.totalorder %s16, 0
      %p59 = por %p57, %p58
      %p60 = scmp.ne.s32.totalorder %s49, %s52
      %p61 = scmp.eq.s32.totalorder %s21, 1
      %p62 = por %p60, %p61
      %p63 = scmp.ne.s32.totalorder %s52, %s53
      %p64 = scmp.eq.s32.totalorder %s21, 0
      %p65 = por %p63, %p64
      %p66 = scmp.ne.s32.totalorder %s52, %s53
      %p67 = scmp.eq.s32.totalorder %s22, 1
      %p68 = por %p66, %p67
      %p70 = scmp.ne.s32.totalorder %s53, %s69
      %p71 = scmp.eq.s32.totalorder %s22, 0
      %p72 = por %p70, %p71
      %s74 = sadd.s32 %s73, 1
      %p77 = scmp.eq.s32.totalorder %s16, 1
      %p78 = scmp.ne.s32.totalorder %s73, %s75
      %p79 = scmp.eq.s32.totalorder %s16, 0
      %p80 = por %p78, %p79
      %p81 = scmp.ne.s32.totalorder %s73, %s75
      %p82 = scmp.eq.s32.totalorder %s21, 1
      %p83 = por %p81, %p82
      %p84 = scmp.ne.s32.totalorder %s75, %s76
      %p85 = scmp.eq.s32.totalorder %s21, 0
      %p86 = por %p84, %p85
      %p87 = scmp.ne.s32.totalorder %s75, %s76
      %p88 = scmp.eq.s32.totalorder %s22, 1
      %p89 = por %p87, %p88
      %p91 = scmp.ne.s32.totalorder %s76, %s90
      %p92 = scmp.eq.s32.totalorder %s22, 0
      %p93 = por %p91, %p92
      %s95 = sadd.s32 %s94, 1
      %p98 = scmp.eq.s32.totalorder %s16, 1
      %p99 = scmp.ne.s32.totalorder %s94, %s96
      %p100 = scmp.eq.s32.totalorder %s16, 0
      %p101 = por %p99, %p100
      %p102 = scmp.ne.s32.totalorder %s94, %s96
      %p103 = scmp.eq.s32.totalorder %s21, 1
      %p104 = por %p102, %p103
      %p105 = scmp.ne.s32.totalorder %s96, %s97
      %p106 = scmp.eq.s32.totalorder %s21, 0
      %p107 = por %p105, %p106
      %p108 = scmp.ne.s32.totalorder %s96, %s97
      %p109 = scmp.eq.s32.totalorder %s22, 1
      %p110 = por %p108, %p109
      %p112 = scmp.ne.s32.totalorder %s97, %s111
      %p113 = scmp.eq.s32.totalorder %s22, 0
      %p114 = por %p112, %p113
      %s115 = ssub.s32 %s23, %s42
      %s116 = ssub.s32 %s24, %s38
      %s117 = sor.u32 %s115, %s116
      %s118 = ssub.s32 %s25, %s34
      %s119 = sor.u32 %s117, %s118
      %p120 = scmp.eq.s32.totalorder %s119, 0
      %s122 = sadd.s32 %s121, 1
      %s123 = scalar_select %p120, %s121, %s122
      %p126 = pneg %p120
      %p127 = scmp.eq.s32.totalorder %s16, 1
      %p128 = por %p126, %p127
      %p129 = scmp.ne.s32.totalorder %s121, %s124
      %p130 = scmp.eq.s32.totalorder %s16, 0
      %p131 = por %p129, %p130
      %p132 = scmp.ne.s32.totalorder %s121, %s124
      %p133 = scmp.eq.s32.totalorder %s21, 1
      %p134 = por %p132, %p133
      %p135 = scmp.ne.s32.totalorder %s124, %s125
      %p136 = scmp.eq.s32.totalorder %s21, 0
      %p137 = por %p135, %p136
      %p138 = scmp.ne.s32.totalorder %s124, %s125
      %p139 = scmp.eq.s32.totalorder %s22, 1
      %p140 = por %p138, %p139
      %p142 = scmp.ne.s32.totalorder %s125, %s141
      %p143 = scmp.eq.s32.totalorder %s22, 0
      %p144 = por %p142, %p143
      %p145 = scmp.le.s32.totalorder 1, %s16
      %p146 = scmp.lt.s32.totalorder %s16, 3
      %p147 = pnand %p145, %p146
      %p148 = pneg %p147
      // Predicated region
      $region9: #{tpu_custom_call.1} parent=5 // pred_check
        _
      $region10: #{tpu_custom_call.1} parent=5 // pred_check_branch
        %150 = sbr.rel (%p147) target = $region12
      $region11: #{tpu_custom_call.1} parent=5 // pred_region
        %s151 = ssub.s32 %s16, 1
        // Predicated region
        $region13: #{tpu_custom_call.1} parent=11 // pred_check
          %p152 = pneg %p86
        $region14: #{tpu_custom_call.1} parent=11 // pred_check_branch
          %154 = sbr.rel (%p152) target = $region16
        $region15: #{tpu_custom_call.1} parent=11 // pred_region
          _
        $region16: #{tpu_custom_call.1} parent=11 // pred_fallthru
          _
        // Predicated region
        $region17: #{tpu_custom_call.1} parent=11 // pred_check
          %p155 = pneg %p107
        $region18: #{tpu_custom_call.1} parent=11 // pred_check_branch
          %157 = sbr.rel (%p155) target = $region20
        $region19: #{tpu_custom_call.1} parent=11 // pred_region
          %159 = vsyncadd [#allocation5], 0
          %s161 = sshll.u32 %s2, 4
          %s162 = int_to_ptr.vmem [resolvable:$true] %s161
          %164 = dma.vmem_to_smem %s162, 128, [#allocation6], [#allocation5]
        $region20: #{tpu_custom_call.1} parent=11 // pred_fallthru
          _
      $region12: #{tpu_custom_call.1} parent=5 // pred_fallthru
        _
      %p165 = scmp.lt.s32.totalorder %s16, 2
      // Predicated region
      $region21: #{tpu_custom_call.1} parent=5 // pred_check
        %p166 = pneg %p165
      $region22: #{tpu_custom_call.1} parent=5 // pred_check_branch
        %168 = sbr.rel (%p166) target = $region24
      $region23: #{tpu_custom_call.1} parent=5 // pred_region
        // Predicated region
        $region25: #{tpu_custom_call.1} parent=23 // pred_check
          %p169 = pneg %p59
        $region26: #{tpu_custom_call.1} parent=23 // pred_check_branch
          %171 = sbr.rel (%p169) target = $region28
        $region27: #{tpu_custom_call.1} parent=23 // pred_region
          %s172 = sand.u32 %s49, 1
          %s173 = scalar_lea.sflag [#allocation3], %s172
          %s174 = sand.u32 %s49, 1
          %s175 = smul.addr %s174, 64
          %s176 = scalar_lea.vmem [#allocation2], %s175
          %s177 = smul.u32 2, %s24
          %179 = vsyncadd %s173, 0
          %s180 = sadd.s32 %s25, %s177
          %s181 = smul.addr %s23, 8
          %s182 = sadd.s32 %s180, %s181
          %s183 = smul.addr %s182, 8
          %s184 = scalar_lea.hbm %s0, %s183
          %s185 = sshll.u32 %s184, 4
          %s186 = int_to_ptr.hbm [resolvable:$true] %s185
          %s187 = sshll.u32 %s176, 4
          %s188 = int_to_ptr.vmem [resolvable:$true] %s187
          %193 = dma.hbm_to_vmem [thread:$0]  %s186, 1024, %s188, %s173, 128, 128, 8
        $region28: #{tpu_custom_call.1} parent=23 // pred_fallthru
          _
      $region24: #{tpu_custom_call.1} parent=5 // pred_fallthru
        _
      %p194 = scmp.le.s32.totalorder 1, %s16
      %p195 = scmp.lt.s32.totalorder %s16, 3
      %p196 = pnand %p194, %p195
      %p197 = pneg %p196
      // Predicated region
      $region29: #{tpu_custom_call.1} parent=5 // pred_check
        _
      $region30: #{tpu_custom_call.1} parent=5 // pred_check_branch
        %199 = sbr.rel (%p196) target = $region32
      $region31: #{tpu_custom_call.1} parent=5 // pred_region
        %s200 = ssub.s32 %s16, 1
        %s201 = sand.u32 %s52, 1
        %s202 = scalar_lea.sflag [#allocation3], %s201
        %s203 = sand.u32 %s52, 1
        %s204 = smul.addr %s203, 64
        %s205 = scalar_lea.vmem [#allocation2], %s204
        // Predicated region
        $region33: #{tpu_custom_call.1} parent=31 // pred_check
          %p206 = pneg %p65
        $region34: #{tpu_custom_call.1} parent=31 // pred_check_branch
          %208 = sbr.rel (%p206) target = $region36
        $region35: #{tpu_custom_call.1} parent=31 // pred_region
          %210 = dma.done %s202, 1024
        $region36: #{tpu_custom_call.1} parent=31 // pred_fallthru
          _
        // Predicated region
        $region37: #{tpu_custom_call.1} parent=31 // pred_check
          %p211 = pneg %p107
        $region38: #{tpu_custom_call.1} parent=31 // pred_check_branch
          %213 = sbr.rel (%p211) target = $region40
        $region39: #{tpu_custom_call.1} parent=31 // pred_region
          %215 = dma.done [#allocation5], 128
        $region40: #{tpu_custom_call.1} parent=31 // pred_fallthru
          _
        %216 = sfence
        %s217 = sand.u32 %s52, 1
        %s218 = scalar_lea.sflag [#allocation3], %s217
        %s219 = sand.u32 %s52, 1
        %s220 = smul.addr %s219, 64
        %s221 = scalar_lea.vmem [#allocation2], %s220
        %p222 = pneg %p65
        %p223 = pneg %p62
        %p224 = pneg %p86
        %p225 = pneg %p83
        %p226 = pneg %p107
        %p227 = pneg %p104
        %p228 = pneg %p137
        %p229 = pneg %p134
        %s230 = sand.u32 %s124, 1
        %s231 = scalar_lea.sflag [#allocation4], %s230
        %s232 = sand.u32 %s124, 1
        %s233 = smul.addr %s232, 64
        %s234 = scalar_lea.vmem [#allocation7], %s233
        %s235 = smul.u32 2, %s27
        %v236 = vld [vmem:[%s205] ss:$2 sm:$0xff]
        %s237 = scalar_lea.vmem %s205, 16 [#allocation2]
        %v238 = vld [vmem:[%s237] ss:$2 sm:$0xff]
        %s239 = scalar_lea.vmem %s205, 32 [#allocation2]
        %v240 = vld [vmem:[%s239] ss:$2 sm:$0xff]
        %s241 = scalar_lea.vmem %s205, 48 [#allocation2]
        %v242 = vld [vmem:[%s241] ss:$2 sm:$0xff]
        %s243 = scalar_lea.vmem %s205, 1 [#allocation2]
        %v244 = vld [vmem:[%s243] ss:$2 sm:$0xff]
        %s245 = scalar_lea.vmem %s205, 17 [#allocation2]
        %v246 = vld [vmem:[%s245] ss:$2 sm:$0xff]
        %s247 = scalar_lea.vmem %s205, 33 [#allocation2]
        %v248 = vld [vmem:[%s247] ss:$2 sm:$0xff]
        %s249 = scalar_lea.vmem %s205, 49 [#allocation2]
        %v250 = vld [vmem:[%s249] ss:$2 sm:$0xff]
        %v251 = vadd.f32 %v236, %v244
        %v252 = vadd.f32 %v238, %v246
        %v253 = vadd.f32 %v240, %v248
        %v254 = vadd.f32 %v242, %v250
        %v255 = vld [vmem:[%s1] sm:$0xff]
        %v256 = vld [vmem:[%s1 + $0x8] sm:$0xff]
        %vm257 = vcmask 130048
        %v259 = vsel %vm257, %v251, 0
        %v262 = vsel %vm257, %v252, 0
        %v265 = vsel %vm257, %v253, 0
        %v268 = vsel %vm257, %v254, 0
        %270 = vmatpush.msra.mxu0 0.0
        %271 = vmatpush.msra.mxu0 0.0
        %272 = vmatpush.msra.mxu0 0.0
        %273 = vmatpush.msra.mxu0 0.0
        %274 = vmatpush.msra.mxu0 0.0
        %275 = vmatpush.msra.mxu0 0.0
        %276 = vmatpush.msra.mxu0 0.0
        %277 = vmatpush.msra.mxu0 0.0
        %278 = vmatpush.msra.mxu0 0.0
        %279 = vmatpush.msra.mxu0 0.0
        %280 = vmatpush.msra.mxu0 0.0
        %281 = vmatpush.msra.mxu0 0.0
        %282 = vmatpush.msra.mxu0 0.0
        %283 = vmatpush.msra.mxu0 0.0
        %284 = vmatpush.msra.mxu0 %v256
        %285 = vmatpush.msra.mxu0 %v255
        %286 = vmatmul.f32.gmra.mxu0 %v259
        %v287 = vpop.f32.mrf.mxu0
        %v288 = vadd.f32 0.0, %v287
        %289 = vmatmul.f32.gmra.mxu0 %v262
        %v290 = vpop.f32.mrf.mxu0
        %v291 = vadd.f32 0.0, %v290
        %292 = vmatmul.f32.gmra.mxu0 %v265
        %v293 = vpop.f32.mrf.mxu0
        %v294 = vadd.f32 0.0, %v293
        %295 = vmatmul.f32.gmra.mxu0 %v268
        %v296 = vpop.f32.mrf.mxu0
        %v297 = vadd.f32 0.0, %v296
        %298 = vdwg.mxu0
        %s299 = sld [smem:[#allocation6]]
        %v300 = vstv %s299
        %v301 = vmul.f32 %v300, %v288
        %s302 = sld [smem:[#allocation6 + $0x1]]
        %v303 = vstv %s302
        %v304 = vmul.f32 %v303, %v291
        %v305 = vadd.f32 %v301, %v304
        %s306 = sld [smem:[#allocation6 + $0x2]]
        %v307 = vstv %s306
        %v308 = vmul.f32 %v307, %v294
        %v309 = vadd.f32 %v305, %v308
        %s310 = sld [smem:[#allocation6 + $0x3]]
        %v311 = vstv %s310
        %v312 = vmul.f32 %v311, %v297
        %v313 = vadd.f32 %v309, %v312
        %vm314 = vcmask 64512
        %315 = vst.msk [vmem:[%s234] sm:$0xff] %vm314, %v313
        %s316 = sld [smem:[#allocation6 + $0x80]]
        %v317 = vstv %s316
        %v318 = vmul.f32 %v317, %v288
        %s319 = sld [smem:[#allocation6 + $0x81]]
        %v320 = vstv %s319
        %v321 = vmul.f32 %v320, %v291
        %v322 = vadd.f32 %v318, %v321
        %s323 = sld [smem:[#allocation6 + $0x82]]
        %v324 = vstv %s323
        %v325 = vmul.f32 %v324, %v294
        %v326 = vadd.f32 %v322, %v325
        %s327 = sld [smem:[#allocation6 + $0x83]]
        %v328 = vstv %s327
        %v329 = vmul.f32 %v328, %v297
        %v330 = vadd.f32 %v326, %v329
        %s331 = scalar_lea.vmem %s234, 8 [#allocation7]
        %332 = vst.msk [vmem:[%s331] sm:$0xff] %vm314, %v330
        %s333 = sld [smem:[#allocation6 + $0x100]]
        %v334 = vstv %s333
        %v335 = vmul.f32 %v334, %v288
        %s336 = sld [smem:[#allocation6 + $0x101]]
        %v337 = vstv %s336
        %v338 = vmul.f32 %v337, %v291
        %v339 = vadd.f32 %v335, %v338
        %s340 = sld [smem:[#allocation6 + $0x102]]
        %v341 = vstv %s340
        %v342 = vmul.f32 %v341, %v294
        %v343 = vadd.f32 %v339, %v342
        %s344 = sld [smem:[#allocation6 + $0x103]]
        %v345 = vstv %s344
        %v346 = vmul.f32 %v345, %v297
        %v347 = vadd.f32 %v343, %v346
        %s348 = scalar_lea.vmem %s234, 16 [#allocation7]
        %349 = vst.msk [vmem:[%s348] sm:$0xff] %vm314, %v347
        %s350 = sld [smem:[#allocation6 + $0x180]]
        %v351 = vstv %s350
        %v352 = vmul.f32 %v351, %v288
        %s353 = sld [smem:[#allocation6 + $0x181]]
        %v354 = vstv %s353
        %v355 = vmul.f32 %v354, %v291
        %v356 = vadd.f32 %v352, %v355
        %s357 = sld [smem:[#allocation6 + $0x182]]
        %v358 = vstv %s357
        %v359 = vmul.f32 %v358, %v294
        %v360 = vadd.f32 %v356, %v359
        %s361 = sld [smem:[#allocation6 + $0x183]]
        %v362 = vstv %s361
        %v363 = vmul.f32 %v362, %v297
        %v364 = vadd.f32 %v360, %v363
        %s365 = scalar_lea.vmem %s234, 24 [#allocation7]
        %366 = vst.msk [vmem:[%s365] sm:$0xff] %vm314, %v364
        %s367 = sld [smem:[#allocation6 + $0x200]]
        %v368 = vstv %s367
        %v369 = vmul.f32 %v368, %v288
        %s370 = sld [smem:[#allocation6 + $0x201]]
        %v371 = vstv %s370
        %v372 = vmul.f32 %v371, %v291
        %v373 = vadd.f32 %v369, %v372
        %s374 = sld [smem:[#allocation6 + $0x202]]
        %v375 = vstv %s374
        %v376 = vmul.f32 %v375, %v294
        %v377 = vadd.f32 %v373, %v376
        %s378 = sld [smem:[#allocation6 + $0x203]]
        %v379 = vstv %s378
        %v380 = vmul.f32 %v379, %v297
        %v381 = vadd.f32 %v377, %v380
        %s382 = scalar_lea.vmem %s234, 32 [#allocation7]
        %383 = vst.msk [vmem:[%s382] sm:$0xff] %vm314, %v381
        %s384 = sld [smem:[#allocation6 + $0x280]]
        %v385 = vstv %s384
        %v386 = vmul.f32 %v385, %v288
        %s387 = sld [smem:[#allocation6 + $0x281]]
        %v388 = vstv %s387
        %v389 = vmul.f32 %v388, %v291
        %v390 = vadd.f32 %v386, %v389
        %s391 = sld [smem:[#allocation6 + $0x282]]
        %v392 = vstv %s391
        %v393 = vmul.f32 %v392, %v294
        %v394 = vadd.f32 %v390, %v393
        %s395 = sld [smem:[#allocation6 + $0x283]]
        %v396 = vstv %s395
        %v397 = vmul.f32 %v396, %v297
        %v398 = vadd.f32 %v394, %v397
        %s399 = scalar_lea.vmem %s234, 40 [#allocation7]
        %400 = vst.msk [vmem:[%s399] sm:$0xff] %vm314, %v398
        %s401 = sld [smem:[#allocation6 + $0x300]]
        %v402 = vstv %s401
        %v403 = vmul.f32 %v402, %v288
        %s404 = sld [smem:[#allocation6 + $0x301]]
        %v405 = vstv %s404
        %v406 = vmul.f32 %v405, %v291
        %v407 = vadd.f32 %v403, %v406
        %s408 = sld [smem:[#allocation6 + $0x302]]
        %v409 = vstv %s408
        %v410 = vmul.f32 %v409, %v294
        %v411 = vadd.f32 %v407, %v410
        %s412 = sld [smem:[#allocation6 + $0x303]]
        %v413 = vstv %s412
        %v414 = vmul.f32 %v413, %v297
        %v415 = vadd.f32 %v411, %v414
        %s416 = scalar_lea.vmem %s234, 48 [#allocation7]
        %417 = vst.msk [vmem:[%s416] sm:$0xff] %vm314, %v415
        %s418 = sld [smem:[#allocation6 + $0x380]]
        %v419 = vstv %s418
        %v420 = vmul.f32 %v419, %v288
        %s421 = sld [smem:[#allocation6 + $0x381]]
        %v422 = vstv %s421
        %v423 = vmul.f32 %v422, %v291
        %v424 = vadd.f32 %v420, %v423
        %s425 = sld [smem:[#allocation6 + $0x382]]
        %v426 = vstv %s425
        %v427 = vmul.f32 %v426, %v294
        %v428 = vadd.f32 %v424, %v427
        %s429 = sld [smem:[#allocation6 + $0x383]]
        %v430 = vstv %s429
        %v431 = vmul.f32 %v430, %v297
        %v432 = vadd.f32 %v428, %v431
        %s433 = scalar_lea.vmem %s234, 56 [#allocation7]
        %434 = vst.msk [vmem:[%s433] sm:$0xff] %vm314, %v432
        %s435 = sand.u32 %s124, 1
        %s436 = scalar_lea.sflag [#allocation4], %s435
        %s437 = sand.u32 %s124, 1
        %s438 = smul.addr %s437, 64
        %s439 = scalar_lea.vmem [#allocation7], %s438
        // Predicated region
        $region41: #{tpu_custom_call.1} parent=31 // pred_check
          %p440 = pneg %p134
        $region42: #{tpu_custom_call.1} parent=31 // pred_check_branch
          %442 = sbr.rel (%p440) target = $region44
        $region43: #{tpu_custom_call.1} parent=31 // pred_region
          %444 = vsyncadd %s436, 0
          %s445 = sadd.s32 %s28, %s27
          %s446 = smul.addr %s26, 8
          %s447 = sadd.s32 %s445, %s446
          %s448 = smul.addr %s447, 8
          %s449 = scalar_lea.hbm %s3, %s448
          %s450 = sshll.u32 %s439, 4
          %s451 = int_to_ptr.vmem [resolvable:$true] %s450
          %s452 = sshll.u32 %s449, 4
          %s453 = int_to_ptr.hbm [resolvable:$true] %s452
          %458 = dma.vmem_to_hbm [thread:$0]  %s451, 1024, %s453, %s436, 128, 128, 8
        $region44: #{tpu_custom_call.1} parent=31 // pred_fallthru
          _
      $region32: #{tpu_custom_call.1} parent=5 // pred_fallthru
        _
      %p459 = scmp.le.s32.totalorder 2, %s16
      // Predicated region
      $region45: #{tpu_custom_call.1} parent=5 // pred_check
        %p460 = pneg %p459
      $region46: #{tpu_custom_call.1} parent=5 // pred_check_branch
        %462 = sbr.rel (%p460) target = $region48
      $region47: #{tpu_custom_call.1} parent=5 // pred_region
        %s463 = ssub.s32 %s16, 2
        // Predicated region
        $region49: #{tpu_custom_call.1} parent=47 // pred_check
          %p464 = pneg %p140
        $region50: #{tpu_custom_call.1} parent=47 // pred_check_branch
          %466 = sbr.rel (%p464) target = $region52
        $region51: #{tpu_custom_call.1} parent=47 // pred_region
          %s467 = sand.u32 %s125, 1
          %s468 = scalar_lea.sflag [#allocation4], %s467
          %s469 = sand.u32 %s125, 1
          %s470 = smul.addr %s469, 64
          %s471 = scalar_lea.vmem [#allocation7], %s470
          %473 = dma.done %s468, 1024
        $region52: #{tpu_custom_call.1} parent=47 // pred_fallthru
          _
      $region48: #{tpu_custom_call.1} parent=5 // pred_fallthru
        _
    $region6: #{tpu_custom_call.1} parent=1 // loop_footer
      %s20 = sadd.s32 1, %s16
    $region7: #{tpu_custom_call.1} parent=1 // loop_footer_branch
      %15 = sbr.rel target = $region3
    $region8: #{tpu_custom_call.1} parent=1 // loop_exit
      _
    %474 = vsyncpa [#allocation3], 1
    %s475 = scalar_lea.sflag [#allocation3], 1
    %476 = vsyncpa %s475, 1
    %477 = vsyncpa [#allocation4], 1
    %s478 = scalar_lea.sflag [#allocation4], 1
    %479 = vsyncpa %s478, 1
    %480 = vsyncpa [#allocation5], 1
    %s481 = scalar_lea.sflag [#allocation5], 1
    %482 = vsyncpa %s481, 1

</llo_original>
